<compile_context>
chip_gen: v5e
topology: v5e:2x2
jax: 0.10.0
libtpu: 0.0.40
codegen_flags: <defaults>
</compile_context>

<pallas_src>
import jax
import jax.numpy as jnp
from jax.experimental import pallas as pl
from jax.experimental.pallas import tpu as pltpu


# ---------------------------------------------------------------------------
# Shared tiled matmul + bias kernel: O = X @ W + b  (f32 accumulation).
# Used for (a) folding W_i0 into the embedding table, (b) the decoder.
# ---------------------------------------------------------------------------
def matmul_bias_kernel(x_ref, w_ref, b_ref, o_ref, acc_ref):
    k = pl.program_id(2)

    @pl.when(k == 0)
    def _():
        acc_ref[...] = jnp.zeros_like(acc_ref)

    acc_ref[...] += jnp.dot(x_ref[...], w_ref[...],
                            preferred_element_type=jnp.float32)

    @pl.when(k == pl.num_programs(2) - 1)
    def _():
        o_ref[...] = (acc_ref[...] + b_ref[...]).astype(o_ref.dtype)


def matmul_bias(x, w, b, *, out_dtype=jnp.float32, tm=256, tn=512, tk=512):
    """x: (M, K), w: (K, N), b: (1, N) -> (M, N). K is a multiple of 128."""
    M, K = x.shape
    N = w.shape[1]
    tm = min(tm, M)
    tn = min(tn, N)
    tk = min(tk, K)
    while K % tk:          # keep the reduction axis exactly tiled
        tk //= 2
    grid = (pl.cdiv(M, tm), pl.cdiv(N, tn), K // tk)
    return pl.pallas_call(
        matmul_bias_kernel,
        out_shape=jax.ShapeDtypeStruct((M, N), out_dtype),
        grid_spec=pltpu.PrefetchScalarGridSpec(
            num_scalar_prefetch=0,
            grid=grid,
            in_specs=[
                pl.BlockSpec((tm, tk), lambda i, j, k: (i, k)),
                pl.BlockSpec((tk, tn), lambda i, j, k: (k, j)),
                pl.BlockSpec((1, tn), lambda i, j, k: (0, j)),
            ],
            out_specs=pl.BlockSpec((tm, tn), lambda i, j, k: (i, j)),
            scratch_shapes=[pltpu.VMEM((tm, tn), jnp.float32)],
        ),
        compiler_params=pltpu.CompilerParams(
            dimension_semantics=("parallel", "parallel", "arbitrary")),
    )(x, w, b)


# ---------------------------------------------------------------------------
# RNN recurrence, time-tiled.
#   grid = (batch_blocks [parallel], time_chunks [arbitrary])
#   x0 already contains (emb @ W_i0 + b0) per step.
#   Hidden state persists across time chunks in the revisited hfin block.
# ---------------------------------------------------------------------------
def rnn_kernel(x0_ref, wh0_ref, w1_ref, b1_ref, out_ref, hfin_ref):
    Ts, tb, Hp = x0_ref.shape
    t_chunk = pl.program_id(1)

    @pl.when(t_chunk == 0)
    def _():
        hfin_ref[...] = jnp.zeros_like(hfin_ref)

    # Hoist the bias broadcast out of the (partially unrolled) time loop.
    b1b = jnp.broadcast_to(b1_ref[...], (tb, Hp))
    mm_dtype = wh0_ref.dtype

    def step(t, carry):
        h0, h1 = carry
        # layer 0: input projection is pre-folded into x0; only h0 @ W_h0 here
        pre0 = (x0_ref[t].astype(jnp.float32)
                + jnp.dot(h0.astype(mm_dtype), wh0_ref[...],
                          preferred_element_type=jnp.float32))
        h0 = jax.nn.sigmoid(pre0)
        # layer 1: fused [h0, h1] @ [W_i1; W_h1]  (one MXU push instead of two)
        h01 = jnp.concatenate([h0, h1], axis=-1).astype(mm_dtype)
        pre1 = jnp.dot(h01, w1_ref[...],
                       preferred_element_type=jnp.float32) + b1b
        h1 = jax.nn.sigmoid(pre1)
        out_ref[pl.ds(t, 1)] = h1[None].astype(out_ref.dtype)
        return (h0, h1)

    h0, h1 = jax.lax.fori_loop(0, Ts, step, (hfin_ref[0], hfin_ref[1]),
                               unroll=min(Ts, 8))
    # Persist the hidden state for the next time chunk (and as final output).
    hfin_ref[0] = h0
    hfin_ref[1] = h1


def rnn_forward(x0, wh0, w1, b1, *, out_dtype, t_chunk, b_block):
    S, Bp, Hp = x0.shape
    nb = Bp // b_block
    nt = S // t_chunk
    return pl.pallas_call(
        rnn_kernel,
        out_shape=(jax.ShapeDtypeStruct((S, Bp, Hp), out_dtype),
                   jax.ShapeDtypeStruct((2, Bp, Hp), jnp.float32)),
        grid_spec=pltpu.PrefetchScalarGridSpec(
            num_scalar_prefetch=0,
            grid=(nb, nt),
            in_specs=[
                pl.BlockSpec((t_chunk, b_block, Hp), lambda b, t: (t, b, 0)),
                pl.BlockSpec((Hp, Hp), lambda b, t: (0, 0)),
                pl.BlockSpec((2 * Hp, Hp), lambda b, t: (0, 0)),
                pl.BlockSpec((1, Hp), lambda b, t: (0, 0)),
            ],
            out_specs=(
                pl.BlockSpec((t_chunk, b_block, Hp), lambda b, t: (t, b, 0)),
                pl.BlockSpec((2, b_block, Hp), lambda b, t: (0, b, 0)),
            ),
        ),
        compiler_params=pltpu.CompilerParams(
            dimension_semantics=("parallel", "arbitrary")),
    )(x0, wh0, w1, b1)


# ---------------------------------------------------------------------------
# Padding / chunking helpers.
# ---------------------------------------------------------------------------
def _rup(n, m):
    return ((n + m - 1) // m) * m


def _pad_to(x, shape):
    return jnp.pad(x, [(0, s - d) for d, s in zip(x.shape, shape)])


def _choose_time_chunk(S, cap=32):
    """Largest chunk <= cap that divides S exactly (keeps the recurrence exact)."""
    if S <= cap:
        return S
    best = 1
    for c in range(1, cap + 1):
        if S % c == 0:
            best = c
    return best


# ---------------------------------------------------------------------------
# Full model wrapper.
# ---------------------------------------------------------------------------
def lmmodel_rnn_forward(tokens, params, *, matmul_dtype=jnp.bfloat16):
    S, B = tokens.shape
    encoder = params["encoder"]                       # (nvoc, D)
    nvoc, D = encoder.shape
    H = params["W_h0"].shape[0]
    V = params["dec_w"].shape[1]

    Bp = _rup(B, 8)
    Dp = _rup(D, 128)
    Hp = _rup(H, 128)
    Vp = _rup(V, 128)
    nvocp = _rup(nvoc, 8)

    # Matmul operands in matmul_dtype (bf16 for production MXU rate / VMEM);
    # biases and all accumulation stay f32. Zero padding is exact in bf16,
    # so padded rows/cols keep the math exact.
    enc_p = _pad_to(encoder, (nvocp, Dp)).astype(matmul_dtype)
    wi0_p = _pad_to(params["W_i0"], (Dp, Hp)).astype(matmul_dtype)
    b0_p = _pad_to(params["b_h0"], (1, Hp)).astype(jnp.float32)
    wh0_p = _pad_to(params["W_h0"], (Hp, Hp)).astype(matmul_dtype)
    # Fused layer-1 weight: [W_i1; W_h1] -> (2*Hp, Hp).
    w1_p = jnp.concatenate(
        [_pad_to(params["W_i1"], (Hp, Hp)),
         _pad_to(params["W_h1"], (Hp, Hp))], axis=0).astype(matmul_dtype)
    b1_p = _pad_to(params["b_h1"], (1, Hp)).astype(jnp.float32)
    dec_w_p = _pad_to(params["dec_w"], (Hp, Vp)).astype(matmul_dtype)
    dec_b_p = _pad_to(params["dec_b"], (1, Vp)).astype(jnp.float32)

    # Fold the layer-0 input projection (+ bias) into the embedding table:
    # one big lane-dense matmul instead of one small matmul per time step.
    enc_proj = matmul_bias(enc_p, wi0_p, b0_p, out_dtype=matmul_dtype)

    # Embedding gather (plain-JAX glue). Dropout == identity (eval mode).
    tok_p = _pad_to(tokens, (S, Bp))
    x0 = jnp.take(enc_proj, tok_p, axis=0)            # (S, Bp, Hp)

    # Serial recurrence, time-tiled; batch split across TCs when possible.
    t_chunk = _choose_time_chunk(S)
    b_block = Bp // 2 if (Bp % 16 == 0) else Bp
    out_p, hfin_p = rnn_forward(x0, wh0_p, w1_p, b1_p,
                                out_dtype=matmul_dtype,
                                t_chunk=t_chunk, b_block=b_block)

    # Decoder as one big lane-dense matmul over (S*Bp, Hp), logits in f32.
    dec_p = matmul_bias(out_p.reshape(S * Bp, Hp), dec_w_p, dec_b_p,
                        out_dtype=jnp.float32)
    dec = dec_p.reshape(S, Bp, Vp)[:, :B, :V]
    hidden = hfin_p[:, :B, :H]
    return dec, hidden


# ---------------------------------------------------------------------------
# Pure-JAX reference for correctness check (matches the PyTorch module).
# ---------------------------------------------------------------------------
def reference_forward(tokens, params):
    emb = jnp.take(params["encoder"], tokens, axis=0)
    S, B, D = emb.shape
    H = params["W_h0"].shape[0]
    h0 = jnp.zeros((B, H), jnp.float32)
    h1 = jnp.zeros((B, H), jnp.float32)
    outs = []
    for t in range(S):
        e = emb[t]
        h0 = jax.nn.sigmoid(e @ params["W_i0"] + h0 @ params["W_h0"]
                            + params["b_h0"][0])
        h1 = jax.nn.sigmoid(h0 @ params["W_i1"] + h1 @ params["W_h1"]
                            + params["b_h1"][0])
        outs.append(h1)
    out = jnp.stack(outs, axis=0)
    dec = out.reshape(S * B, H) @ params["dec_w"] + params["dec_b"][0]
    return dec.reshape(S, B, -1), jnp.stack([h0, h1], axis=0)


if __name__ == "__main__":
    # Small, deterministic config consistent with the module.
    nvoc, dim, hidden, num_layers = 64, 32, 32, 2
    seq_len, batch = 8, 4

    key = jax.random.PRNGKey(0)
    ks = jax.random.split(key, 8)
    u = 0.1
    params = {
        "encoder": jax.random.uniform(ks[0], (nvoc, dim), jnp.float32, -u, u),
        "W_i0": jax.random.uniform(ks[1], (dim, hidden), jnp.float32, -u, u),
        "W_h0": jax.random.uniform(ks[2], (hidden, hidden), jnp.float32, -u, u),
        "b_h0": jnp.zeros((1, hidden), jnp.float32),
        "W_i1": jax.random.uniform(ks[3], (hidden, hidden), jnp.float32, -u, u),
        "W_h1": jax.random.uniform(ks[4], (hidden, hidden), jnp.float32, -u, u),
        "b_h1": jnp.zeros((1, hidden), jnp.float32),
        # PyTorch decoder.weight is (nvoc, hidden); store pre-transposed (hidden, nvoc).
        "dec_w": jax.random.uniform(ks[5], (nvoc, hidden), jnp.float32, -u, u).T,
        "dec_b": jnp.zeros((1, nvoc), jnp.float32),
    }

    tokens = jax.random.randint(ks[6], (seq_len, batch), 0, nvoc, dtype=jnp.int32)

    ref_logits, ref_hidden = reference_forward(tokens, params)

    # f32 matmul path: bit-tight against the f32 reference.
    logits, hidden_states = lmmodel_rnn_forward(tokens, params,
                                                matmul_dtype=jnp.float32)
    logits = jax.block_until_ready(logits)
    hidden_states = jax.block_until_ready(hidden_states)
    assert logits.shape == (seq_len, batch, nvoc)
    assert hidden_states.shape == (num_layers, batch, hidden)
    assert jnp.allclose(logits, ref_logits, atol=1e-5), "f32 logits mismatch"
    assert jnp.allclose(hidden_states, ref_hidden, atol=1e-5), "f32 hidden mismatch"

    # bf16-operand / f32-accumulate path (production default): loose tolerance.
    logits_bf, hidden_bf = lmmodel_rnn_forward(tokens, params,
                                               matmul_dtype=jnp.bfloat16)
    logits_bf = jax.block_until_ready(logits_bf)
    hidden_bf = jax.block_until_ready(hidden_bf)
    assert jnp.allclose(logits_bf, ref_logits, atol=5e-2, rtol=5e-2), \
        "bf16 logits mismatch"
    assert jnp.allclose(hidden_bf, ref_hidden, atol=5e-2, rtol=5e-2), \
        "bf16 hidden mismatch"

    print("KERNEL_OK")
</pallas_src>

<mosaic_0001>
module attributes {stable_mosaic.version = 11 : i64} {
  func.func @matmul_bias_kernel(%arg0: i32, %arg1: i32, %arg2: i32, %arg3: memref<64x128xf32, #tpu.memory_space<vmem>>, %arg4: memref<128x128xf32, #tpu.memory_space<vmem>>, %arg5: memref<1x128xf32, #tpu.memory_space<vmem>>, %arg6: memref<64x128xf32, #tpu.memory_space<vmem>>, %arg7: memref<64x128xf32, #tpu.memory_space<vmem>>) attributes {dimension_semantics = [#tpu.dimension_semantics<parallel>, #tpu.dimension_semantics<parallel>, #tpu.dimension_semantics<arbitrary>], iteration_bounds = array<i64: 1, 1, 1>, scalar_prefetch = 0 : i64, scratch_operands = 1 : i64, tpu.core_type = #tpu.core_type<tc>, window_params = [{transform_indices = @transform_0, window_bounds = array<i64: 64, 128>}, {transform_indices = @transform_1, window_bounds = array<i64: 128, 128>}, {transform_indices = @transform_2, window_bounds = array<i64: 1, 128>}, {transform_indices = @transform_3, window_bounds = array<i64: 64, 128>}]} {
    %c0_i32 = arith.constant 0 : i32
    %0 = arith.cmpi eq, %arg2, %c0_i32 : i32
    %1 = arith.extui %0 : i1 to i32
    %c0_i32_0 = arith.constant 0 : i32
    %2 = arith.cmpi ne, %1, %c0_i32_0 : i32
    scf.if %2 {
      %cst_10 = arith.constant 0.000000e+00 : f32
      %12 = vector.broadcast %cst_10 : f32 to vector<64x128xf32>
      %c0_11 = arith.constant 0 : index
      %c0_12 = arith.constant 0 : index
      %13 = vector.load %arg7[%c0_11, %c0_12] : memref<64x128xf32, #tpu.memory_space<vmem>>, vector<64x128xf32>
      tpu.vector_store %arg7[%c0_11, %c0_12], %12 {strides = array<i32>} : memref<64x128xf32, #tpu.memory_space<vmem>>, vector<64x128xf32>,
    } else {
    }
    %c0 = arith.constant 0 : index
    %c0_1 = arith.constant 0 : index
    %3 = vector.load %arg7[%c0, %c0_1] : memref<64x128xf32, #tpu.memory_space<vmem>>, vector<64x128xf32>
    %c0_2 = arith.constant 0 : index
    %c0_3 = arith.constant 0 : index
    %4 = vector.load %arg3[%c0_2, %c0_3] : memref<64x128xf32, #tpu.memory_space<vmem>>, vector<64x128xf32>
    %c0_4 = arith.constant 0 : index
    %c0_5 = arith.constant 0 : index
    %5 = vector.load %arg4[%c0_4, %c0_5] : memref<128x128xf32, #tpu.memory_space<vmem>>, vector<128x128xf32>
    %cst = arith.constant dense<0.000000e+00> : vector<64x128xf32>
    %6 = tpu.matmul %4, %5, %cst {dimension_numbers = #tpu.dot_dimension_numbers<[1], [0], [0], [1], [0, 0, 1, 1], [], []>} : vector<64x128xf32>, vector<128x128xf32>, vector<64x128xf32> -> vector<64x128xf32>
    %7 = arith.addf %3, %6 : vector<64x128xf32>
    %c0_6 = arith.constant 0 : index
    %c0_7 = arith.constant 0 : index
    %8 = vector.load %arg7[%c0_6, %c0_7] : memref<64x128xf32, #tpu.memory_space<vmem>>, vector<64x128xf32>
    tpu.vector_store %arg7[%c0_6, %c0_7], %7 {strides = array<i32>} : memref<64x128xf32, #tpu.memory_space<vmem>>, vector<64x128xf32>,
    %c0_i32_8 = arith.constant 0 : i32
    %9 = arith.cmpi eq, %arg2, %c0_i32_8 : i32
    %10 = arith.extui %9 : i1 to i32
    %c0_i32_9 = arith.constant 0 : i32
    %11 = arith.cmpi ne, %10, %c0_i32_9 : i32
    scf.if %11 {
      %c0_10 = arith.constant 0 : index
      %c0_11 = arith.constant 0 : index
      %12 = vector.load %arg7[%c0_10, %c0_11] : memref<64x128xf32, #tpu.memory_space<vmem>>, vector<64x128xf32>
      %c0_12 = arith.constant 0 : index
      %c0_13 = arith.constant 0 : index
      %13 = vector.load %arg5[%c0_12, %c0_13] : memref<1x128xf32, #tpu.memory_space<vmem>>, vector<1x128xf32>
      %14 = vector.broadcast %13 : vector<1x128xf32> to vector<64x128xf32>
      %15 = arith.addf %12, %14 : vector<64x128xf32>
      %c0_14 = arith.constant 0 : index
      %c0_15 = arith.constant 0 : index
      %16 = vector.load %arg6[%c0_14, %c0_15] : memref<64x128xf32, #tpu.memory_space<vmem>>, vector<64x128xf32>
      tpu.vector_store %arg6[%c0_14, %c0_15], %15 {strides = array<i32>} : memref<64x128xf32, #tpu.memory_space<vmem>>, vector<64x128xf32>,
    } else {
    }
    return
  }
  func.func @transform_0(%arg0: i32, %arg1: i32, %arg2: i32) -> (i32, i32) {
    %c0_i32 = arith.constant 0 : i32
    return %arg0, %arg2 : i32, i32
  }
  func.func @transform_1(%arg0: i32, %arg1: i32, %arg2: i32) -> (i32, i32) {
    %c0_i32 = arith.constant 0 : i32
    return %arg2, %arg1 : i32, i32
  }
  func.func @transform_2(%arg0: i32, %arg1: i32, %arg2: i32) -> (i32, i32) {
    %c0_i32 = arith.constant 0 : i32
    %c0_i32_0 = arith.constant 0 : i32
    return %c0_i32, %arg1 : i32, i32
  }
  func.func @transform_3(%arg0: i32, %arg1: i32, %arg2: i32) -> (i32, i32) {
    %c0_i32 = arith.constant 0 : i32
    return %arg0, %arg1 : i32, i32
  }
}

</mosaic_0001>

<llo_original>
// kernel: tpu_custom_call.1
$region0: #{tpu_custom_call.1}
  #allocation0 [shape = 'u32[]', space=smem, size = 0x4, offset = 0x4, fixed_abs, tag = 'smem constant byte address 0x4 - core index']
  #allocation1 [shape = 'u32[72,128]{1,0:T(1,128)}', space=vmem, size = 0x9000, scoped, tag = 'internal scratch']
  #allocation2 [shape = 'f32[64,128]{1,0:T(8,128)}', space=vmem, size = 0x8000, scoped, tag = 'scratch operand']
  %s0 = inlined_call_operand.hbm [shape: f32[64,128], index: 0, kind: input, shape index: {}]
  %s1 = inlined_call_operand.hbm [shape: f32[128,128], index: 1, kind: input, shape index: {}]
  %s2 = inlined_call_operand.vmem [shape: f32[1,128], index: 2, kind: input, shape index: {}]
  %s3 = inlined_call_operand.hbm [shape: f32[64,128], index: 3, kind: output, shape index: {}]
  %s4 = sld [smem:[#allocation0]]
  $region38: #{tpu_custom_call.1} parent=0
    _
  %s6 = ssub.s32 1, %s4
  %s7 = scalar_select 0, %s6, %s4
  $region1: #{tpu_custom_call.1} parent=0
    #allocation3 [shape = 'u8[32768]{0}', space=vmem, size = 0x8000, scoped, tag = 'input window, operand 0, single buffered']
    #allocation4 [shape = 's32[1]{0}', space=sflag, size = 0x4, scoped, tag = 'scoped memory for tpu_custom_call.1']
    #allocation5 [shape = 's32[1]{0}', space=sflag, size = 0x4, scoped, tag = 'scoped memory for tpu_custom_call.1']
    #allocation6 [shape = 'u8[65536]{0}', space=vmem, size = 0x10000, scoped, tag = 'input window, operand 1, single buffered']
    #allocation7 [shape = 's32[1]{0}', space=sflag, size = 0x4, scoped, tag = 'scoped memory for tpu_custom_call.1']
    #allocation8 [shape = 'u8[32768]{0}', space=vmem, size = 0x8000, scoped, tag = 'output window, operand 0, single buffered']
    %8 = vsyncpa [#allocation4], 0
    %9 = vsyncpa [#allocation7], 0
    %10 = vsyncpa [#allocation5], 0
    // Predicated region
    $region2: #{tpu_custom_call.1} parent=1 // pred_check
      _
    $region3: #{tpu_custom_call.1} parent=1 // pred_check_branch
      %12 = sbr.rel (0) target = $region5
    $region4: #{tpu_custom_call.1} parent=1 // pred_region
      %14 = vsyncadd [#allocation4], 0
      %s15 = sshll.u32 %s0, 4
      %s16 = int_to_ptr.hbm [resolvable:$true] %s15
      %s17 = sshll.u32 [#allocation3], 4
      %s18 = int_to_ptr.vmem [resolvable:$true] %s17
      %23 = dma.hbm_to_vmem [thread:$0]  %s16, 1024, %s18, [#allocation4], 128, 128, 8
    $region5: #{tpu_custom_call.1} parent=1 // pred_fallthru
      _
    // Predicated region
    $region6: #{tpu_custom_call.1} parent=1 // pred_check
      _
    $region7: #{tpu_custom_call.1} parent=1 // pred_check_branch
      %25 = sbr.rel (0) target = $region9
    $region8: #{tpu_custom_call.1} parent=1 // pred_region
      %27 = vsyncadd [#allocation7], 0
      %s28 = sshll.u32 %s1, 4
      %s29 = int_to_ptr.hbm [resolvable:$true] %s28
      %s30 = sshll.u32 [#allocation6], 4
      %s31 = int_to_ptr.vmem [resolvable:$true] %s30
      %36 = dma.hbm_to_vmem [thread:$0]  %s29, 2048, %s31, [#allocation7], 128, 128, 8
    $region9: #{tpu_custom_call.1} parent=1 // pred_fallthru
      _
    // Predicated region
    $region10: #{tpu_custom_call.1} parent=1 // pred_check
      _
    $region11: #{tpu_custom_call.1} parent=1 // pred_check_branch
      %38 = sbr.rel (0) target = $region13
    $region12: #{tpu_custom_call.1} parent=1 // pred_region
      _
    $region13: #{tpu_custom_call.1} parent=1 // pred_fallthru
      _
    // Predicated region
    $region14: #{tpu_custom_call.1} parent=1 // pred_check
      _
    $region15: #{tpu_custom_call.1} parent=1 // pred_check_branch
      %40 = sbr.rel (0) target = $region17
    $region16: #{tpu_custom_call.1} parent=1 // pred_region
      %42 = dma.done [#allocation4], 1024
    $region17: #{tpu_custom_call.1} parent=1 // pred_fallthru
      _
    // Predicated region
    $region18: #{tpu_custom_call.1} parent=1 // pred_check
      _
    $region19: #{tpu_custom_call.1} parent=1 // pred_check_branch
      %44 = sbr.rel (0) target = $region21
    $region20: #{tpu_custom_call.1} parent=1 // pred_region
      %46 = dma.done [#allocation7], 2048
    $region21: #{tpu_custom_call.1} parent=1 // pred_fallthru
      _
    %p47 = scmp.eq.s32.totalorder 0, 0
    // Predicated region
    $region22: #{tpu_custom_call.1} parent=1 // pred_check
      %p48 = pneg %p47
    $region23: #{tpu_custom_call.1} parent=1 // pred_check_branch
      %50 = sbr.rel (%p48) target = $region25
    $region24: #{tpu_custom_call.1} parent=1 // pred_region
      %51 = vst [vmem:[#allocation2] sm:$0xff] 0.0
      %52 = vst [vmem:[#allocation2 + $0x8] sm:$0xff] 0.0
      %53 = vst [vmem:[#allocation2 + $0x10] sm:$0xff] 0.0
      %54 = vst [vmem:[#allocation2 + $0x18] sm:$0xff] 0.0
      %55 = vst [vmem:[#allocation2 + $0x20] sm:$0xff] 0.0
      %56 = vst [vmem:[#allocation2 + $0x28] sm:$0xff] 0.0
      %57 = vst [vmem:[#allocation2 + $0x30] sm:$0xff] 0.0
      %58 = vst [vmem:[#allocation2 + $0x38] sm:$0xff] 0.0
    $region25: #{tpu_custom_call.1} parent=1 // pred_fallthru
      _
    %v59 = vld [vmem:[#allocation2] sm:$0xff]
    %v60 = vld [vmem:[#allocation2 + $0x8] sm:$0xff]
    %v61 = vld [vmem:[#allocation2 + $0x10] sm:$0xff]
    %v62 = vld [vmem:[#allocation2 + $0x18] sm:$0xff]
    %v63 = vld [vmem:[#allocation2 + $0x20] sm:$0xff]
    %v64 = vld [vmem:[#allocation2 + $0x28] sm:$0xff]
    %v65 = vld [vmem:[#allocation2 + $0x30] sm:$0xff]
    %v66 = vld [vmem:[#allocation2 + $0x38] sm:$0xff]
    %v67 = vld [vmem:[#allocation3] sm:$0xff]
    %v68 = vld [vmem:[#allocation3 + $0x8] sm:$0xff]
    %v69 = vld [vmem:[#allocation3 + $0x10] sm:$0xff]
    %v70 = vld [vmem:[#allocation3 + $0x18] sm:$0xff]
    %v71 = vld [vmem:[#allocation3 + $0x20] sm:$0xff]
    %v72 = vld [vmem:[#allocation3 + $0x28] sm:$0xff]
    %v73 = vld [vmem:[#allocation3 + $0x30] sm:$0xff]
    %v74 = vld [vmem:[#allocation3 + $0x38] sm:$0xff]
    %v75 = vld [vmem:[#allocation6] sm:$0xff]
    %v76 = vld [vmem:[#allocation6 + $0x8] sm:$0xff]
    %v77 = vld [vmem:[#allocation6 + $0x10] sm:$0xff]
    %v78 = vld [vmem:[#allocation6 + $0x18] sm:$0xff]
    %v79 = vld [vmem:[#allocation6 + $0x20] sm:$0xff]
    %v80 = vld [vmem:[#allocation6 + $0x28] sm:$0xff]
    %v81 = vld [vmem:[#allocation6 + $0x30] sm:$0xff]
    %v82 = vld [vmem:[#allocation6 + $0x38] sm:$0xff]
    %v83 = vld [vmem:[#allocation6 + $0x40] sm:$0xff]
    %v84 = vld [vmem:[#allocation6 + $0x48] sm:$0xff]
    %v85 = vld [vmem:[#allocation6 + $0x50] sm:$0xff]
    %v86 = vld [vmem:[#allocation6 + $0x58] sm:$0xff]
    %v87 = vld [vmem:[#allocation6 + $0x60] sm:$0xff]
    %v88 = vld [vmem:[#allocation6 + $0x68] sm:$0xff]
    %v89 = vld [vmem:[#allocation6 + $0x70] sm:$0xff]
    %v90 = vld [vmem:[#allocation6 + $0x78] sm:$0xff]
    %91 = vmatpush.msra.mxu0 %v90
    %92 = vmatpush.msra.mxu0 %v89
    %93 = vmatpush.msra.mxu0 %v88
    %94 = vmatpush.msra.mxu0 %v87
    %95 = vmatpush.msra.mxu0 %v86
    %96 = vmatpush.msra.mxu0 %v85
    %97 = vmatpush.msra.mxu0 %v84
    %98 = vmatpush.msra.mxu0 %v83
    %99 = vmatpush.msra.mxu0 %v82
    %100 = vmatpush.msra.mxu0 %v81
    %101 = vmatpush.msra.mxu0 %v80
    %102 = vmatpush.msra.mxu0 %v79
    %103 = vmatpush.msra.mxu0 %v78
    %104 = vmatpush.msra.mxu0 %v77
    %105 = vmatpush.msra.mxu0 %v76
    %106 = vmatpush.msra.mxu0 %v75
    %107 = vmatmul.f32.gmra.mxu0 %v67
    %v108 = vpop.f32.mrf.mxu0
    %v109 = vadd.f32 0.0, %v108
    %110 = vmatmul.f32.gmra.mxu0 %v68
    %v111 = vpop.f32.mrf.mxu0
    %v112 = vadd.f32 0.0, %v111
    %113 = vmatmul.f32.gmra.mxu0 %v69
    %v114 = vpop.f32.mrf.mxu0
    %v115 = vadd.f32 0.0, %v114
    %116 = vmatmul.f32.gmra.mxu0 %v70
    %v117 = vpop.f32.mrf.mxu0
    %v118 = vadd.f32 0.0, %v117
    %119 = vmatmul.f32.gmra.mxu0 %v71
    %v120 = vpop.f32.mrf.mxu0
    %v121 = vadd.f32 0.0, %v120
    %122 = vmatmul.f32.gmra.mxu0 %v72
    %v123 = vpop.f32.mrf.mxu0
    %v124 = vadd.f32 0.0, %v123
    %125 = vmatmul.f32.gmra.mxu0 %v73
    %v126 = vpop.f32.mrf.mxu0
    %v127 = vadd.f32 0.0, %v126
    %128 = vmatmul.f32.gmra.mxu0 %v74
    %v129 = vpop.f32.mrf.mxu0
    %v130 = vadd.f32 0.0, %v129
    %131 = vdwg.mxu0
    %v132 = vadd.f32 %v59, %v109
    %v133 = vadd.f32 %v60, %v112
    %v134 = vadd.f32 %v61, %v115
    %v135 = vadd.f32 %v62, %v118
    %v136 = vadd.f32 %v63, %v121
    %v137 = vadd.f32 %v64, %v124
    %v138 = vadd.f32 %v65, %v127
    %v139 = vadd.f32 %v66, %v130
    %140 = vst [vmem:[#allocation2] sm:$0xff] %v132
    %141 = vst [vmem:[#allocation2 + $0x8] sm:$0xff] %v133
    %142 = vst [vmem:[#allocation2 + $0x10] sm:$0xff] %v134
    %143 = vst [vmem:[#allocation2 + $0x18] sm:$0xff] %v135
    %144 = vst [vmem:[#allocation2 + $0x20] sm:$0xff] %v136
    %145 = vst [vmem:[#allocation2 + $0x28] sm:$0xff] %v137
    %146 = vst [vmem:[#allocation2 + $0x30] sm:$0xff] %v138
    %147 = vst [vmem:[#allocation2 + $0x38] sm:$0xff] %v139
    // Predicated region
    $region26: #{tpu_custom_call.1} parent=1 // pred_check
      %p148 = pneg %p47
    $region27: #{tpu_custom_call.1} parent=1 // pred_check_branch
      %150 = sbr.rel (%p148) target = $region29
    $region28: #{tpu_custom_call.1} parent=1 // pred_region
      %v151 = vld [vmem:[#allocation2] sm:$0xff]
      %v152 = vld [vmem:[#allocation2 + $0x8] sm:$0xff]
      %v153 = vld [vmem:[#allocation2 + $0x10] sm:$0xff]
      %v154 = vld [vmem:[#allocation2 + $0x18] sm:$0xff]
      %v155 = vld [vmem:[#allocation2 + $0x20] sm:$0xff]
      %v156 = vld [vmem:[#allocation2 + $0x28] sm:$0xff]
      %v157 = vld [vmem:[#allocation2 + $0x30] sm:$0xff]
      %v158 = vld [vmem:[#allocation2 + $0x38] sm:$0xff]
      %v159 = vld [vmem:[%s2] sm:$0x1]
      %v161 = vperm.slane %v159, 0
      %v163 = vadd.f32 %v151, %v161
      %v164 = vadd.f32 %v152, %v161
      %v165 = vadd.f32 %v153, %v161
      %v166 = vadd.f32 %v154, %v161
      %v167 = vadd.f32 %v155, %v161
      %v168 = vadd.f32 %v156, %v161
      %v169 = vadd.f32 %v157, %v161
      %v170 = vadd.f32 %v158, %v161
      %171 = vst [vmem:[#allocation8] sm:$0xff] %v163
      %172 = vst [vmem:[#allocation8 + $0x8] sm:$0xff] %v164
      %173 = vst [vmem:[#allocation8 + $0x10] sm:$0xff] %v165
      %174 = vst [vmem:[#allocation8 + $0x18] sm:$0xff] %v166
      %175 = vst [vmem:[#allocation8 + $0x20] sm:$0xff] %v167
      %176 = vst [vmem:[#allocation8 + $0x28] sm:$0xff] %v168
      %177 = vst [vmem:[#allocation8 + $0x30] sm:$0xff] %v169
      %178 = vst [vmem:[#allocation8 + $0x38] sm:$0xff] %v170
    $region29: #{tpu_custom_call.1} parent=1 // pred_fallthru
      _
    // Predicated region
    $region30: #{tpu_custom_call.1} parent=1 // pred_check
      _
    $region31: #{tpu_custom_call.1} parent=1 // pred_check_branch
      %180 = sbr.rel (0) target = $region33
    $region32: #{tpu_custom_call.1} parent=1 // pred_region
      %182 = vsyncadd [#allocation5], 0
      %s183 = sshll.u32 [#allocation8], 4
      %s184 = int_to_ptr.vmem [resolvable:$true] %s183
      %s185 = sshll.u32 %s3, 4
      %s186 = int_to_ptr.hbm [resolvable:$true] %s185
      %191 = dma.vmem_to_hbm [thread:$0]  %s184, 1024, %s186, [#allocation5], 128, 128, 8
    $region33: #{tpu_custom_call.1} parent=1 // pred_fallthru
      _
    // Predicated region
    $region34: #{tpu_custom_call.1} parent=1 // pred_check
      _
    $region35: #{tpu_custom_call.1} parent=1 // pred_check_branch
      %193 = sbr.rel (0) target = $region37
    $region36: #{tpu_custom_call.1} parent=1 // pred_region
      %195 = dma.done [#allocation5], 1024
    $region37: #{tpu_custom_call.1} parent=1 // pred_fallthru
      _
    %196 = vsyncpa [#allocation4], 1
    %197 = vsyncpa [#allocation7], 1
    %198 = vsyncpa [#allocation5], 1

</llo_original>
